<compile_context>
chip_gen: v7x
topology: tpu7x:2x2x1
jax: 0.10.0
libtpu: 0.0.40
codegen_flags: <defaults>
</compile_context>

<pallas_src>
import functools

import jax
import jax.numpy as jnp
from jax.experimental import pallas as pl
from jax.experimental.pallas import tpu as pltpu

DIM = 2       # feature dimension of the flow
K = 6         # number of stacked planar transforms
LANE = 128    # TPU lane width
_PSTRIDE = 8  # per-layer stride in the flat SMEM parameter table


def _planar_flow_kernel(params_ref, z_ref, zo_ref, ld_ref):
    # params_ref: (K*8,) f32 in SMEM; layer k at offset 8k:
    #   [u_hat0, u_hat1, w0, w1, b, w·u_hat, 1 + w·u_hat, 0]
    # z_ref / zo_ref: (DIM, TM, 128) in VMEM.   ld_ref: (TM, 128) f32 in VMEM.
    z0 = z_ref[0].astype(jnp.float32)          # feature-0 slab, (TM, 128)
    z1 = z_ref[1].astype(jnp.float32)          # feature-1 slab, (TM, 128)
    det_prod = jnp.ones_like(z0)               # running product of (|det_k| + 1e-8)

    for k in range(K):                         # K is small & static: fully unrolled
        base = k * _PSTRIDE                    # scalar SMEM reads, splat on use
        u0 = params_ref[base + 0]
        u1 = params_ref[base + 1]
        w0 = params_ref[base + 2]
        w1 = params_ref[base + 3]
        bk = params_ref[base + 4]
        wu = params_ref[base + 5]              # w_k · u_hat_k
        c1 = params_ref[base + 6]              # 1 + w_k · u_hat_k (precomputed)

        lin = z0 * w0 + z1 * w1 + bk           # z @ w_k^T + b_k, pure VPU lane math
        h = jnp.tanh(lin)                      # EUP
        # |1 + (1 - h^2) * wu| == |c1 - wu * h^2|   (one fewer VALU op per layer)
        det_prod = det_prod * (jnp.abs(c1 - wu * (h * h)) + 1e-8)
        z0 = z0 + u0 * h
        z1 = z1 + u1 * h

    zo_ref[0] = z0.astype(zo_ref.dtype)
    zo_ref[1] = z1.astype(zo_ref.dtype)
    # single log of the product == sum over k of log(|det_k| + 1e-8)
    ld_ref[...] = jnp.log(det_prod).astype(ld_ref.dtype)


def planar_flow_params(u, w, b):
    """Fold all parameter-only math into a flat (K*8,) f32 table (lives in SMEM)."""
    u = u.astype(jnp.float32)
    w = w.astype(jnp.float32)
    b = b.astype(jnp.float32)
    wu = jnp.sum(w * u, axis=-1, keepdims=True)                            # (K, 1)
    m_wu = -1.0 + jax.nn.softplus(wu)                                      # (K, 1)
    u_hat = u + (m_wu - wu) * w / jnp.sum(w * w, axis=-1, keepdims=True)   # (K, DIM)
    wu_hat = jnp.sum(w * u_hat, axis=-1, keepdims=True)                    # (K, 1)
    c1 = 1.0 + wu_hat                                                      # (K, 1)
    return jnp.concatenate(
        [u_hat, w, b.reshape(K, 1), wu_hat, c1, jnp.zeros((K, 1), jnp.float32)],
        axis=1).reshape(K * _PSTRIDE)


def _pick_tm(m, block_m):
    """Sublane-tile rows: largest multiple of 8 that divides m, is <= block_m, and
    leaves >= 2 grid steps whenever m >= 16 (feeds both TensorCores on v7x)."""
    tm = max(8, min((block_m // 8) * 8, m))
    if m >= 16:
        tm = min(tm, max(8, (m // 2 // 8) * 8))
    while m % tm:
        tm -= 8
    return tm


@functools.partial(jax.jit, static_argnames=("block_m",))
def planar_flow_lane_major(params, z_lanes, *, block_m=1024):
    """Lane-major entry point (no layout copies).

    params: (K*8,) f32 table from planar_flow_params.
    z_lanes: (DIM, M, 128) with the batch on the 128-lane axis; M % 8 == 0.
    Returns (z_out (DIM, M, 128) in z_lanes.dtype, log_det (M, 128) f32).
    Chain flow stages through this variant to avoid wrapper-side pad/transpose HBM
    traffic; on v5e, pass bf16 z_lanes to halve HBM bytes (math stays f32 in-kernel).
    """
    dim, m, lane = z_lanes.shape
    assert dim == DIM and lane == LANE and m % 8 == 0
    tm = _pick_tm(m, block_m)
    grid = (m // tm,)
    n_tot = m * LANE
    bps = jnp.dtype(z_lanes.dtype).itemsize

    cost = pl.CostEstimate(
        flops=n_tot * (K * 16 + 2),
        transcendentals=n_tot * (K + 1),
        bytes_accessed=n_tot * (2 * DIM * bps + 4),   # read z, write z_out + log_det
    )

    return pl.pallas_call(
        _planar_flow_kernel,
        out_shape=(
            jax.ShapeDtypeStruct((DIM, m, LANE), z_lanes.dtype),
            jax.ShapeDtypeStruct((m, LANE), jnp.float32),
        ),
        grid=grid,
        in_specs=[
            pl.BlockSpec(memory_space=pltpu.MemorySpace.SMEM),   # whole param table
            pl.BlockSpec((DIM, tm, LANE), lambda i: (0, i, 0)),  # z tile (lane-dense)
        ],
        out_specs=(
            pl.BlockSpec((DIM, tm, LANE), lambda i: (0, i, 0)),  # z_out tile
            pl.BlockSpec((tm, LANE), lambda i: (i, 0)),          # log_det tile
        ),
        input_output_aliases={1: 0},              # reuse the z buffer for z_out
        cost_estimate=cost,
        compiler_params=pltpu.CompilerParams(dimension_semantics=("parallel",)),
    )(params, z_lanes)


@functools.partial(jax.jit, static_argnames=("block_m",))
def planar_flow(z, u, w, b, *, block_m=1024):
    """z: (N, DIM) f32.  u, w: (K, DIM).  b: (K,).
    Returns (z_out (N, DIM), log_det_J (N, 1)).

    NOTE: this (N, 2) interface needs a pad + transpose on each side (extra HBM
    traffic); chained flow stages should use planar_flow_lane_major directly.
    """
    n = z.shape[0]
    params = planar_flow_params(u, w, b)

    # ---- lane-major layout: batch on the 128-lane axis, tiled along sublanes ----
    m_raw = -(-n // LANE)                          # rows of 128 samples needed
    m_min = max(8, -(-m_raw // 8) * 8)             # rounded up to a sublane multiple
    tm = _pick_tm(m_min, block_m)                  # adaptive tile (>=2 steps if work)
    tile = tm * LANE
    n_pad = -(-n // tile) * tile
    m = n_pad // LANE                              # multiple of tm by construction

    z_t = jnp.pad(z.astype(jnp.float32), ((0, n_pad - n), (0, 0)))
    z_t = z_t.T.reshape(DIM, m, LANE)              # (DIM, M, 128)

    z_out_t, ld_t = planar_flow_lane_major(params, z_t, block_m=tm)

    z_out = z_out_t.reshape(DIM, n_pad).T[:n].astype(z.dtype)
    log_det = ld_t.reshape(n_pad)[:n].reshape(n, 1)
    return z_out, log_det


def _reference(z, u, w, b):
    """Pure-JAX reference mirroring the PyTorch module, for a correctness check."""
    wu = jnp.sum(w * u, axis=-1, keepdims=True)
    m_wu = -1.0 + jax.nn.softplus(wu)
    u_hat = u + (m_wu - wu) * w / jnp.sum(w * w, axis=-1, keepdims=True)
    log_det = jnp.zeros((z.shape[0], 1), jnp.float32)
    for k in range(K):
        lin = z @ w[k:k + 1, :].T + b[k]
        h = jnp.tanh(lin)
        h_prime = 1.0 - h ** 2
        wu_k = jnp.sum(w[k] * u_hat[k])
        log_det = log_det + jnp.log(jnp.abs(1.0 + h_prime * wu_k) + 1e-8)
        z = z + u_hat[k:k + 1, :] * h
    return z, log_det


if __name__ == "__main__":
    key = jax.random.PRNGKey(0)
    kz, ku, kw, kb = jax.random.split(key, 4)

    # Deterministic synthetic parameters (shapes match nn.Parameter(randn(1, dim)*0.01) per layer).
    u = jax.random.normal(ku, (K, DIM), dtype=jnp.float32) * 0.01
    w = jax.random.normal(kw, (K, DIM), dtype=jnp.float32) * 0.01 + 0.1  # keep ||w|| away from 0
    b = jax.random.normal(kb, (K,), dtype=jnp.float32) * 0.01

    # Primary small run: batch of 1024 samples through the 2-D planar flow.
    N = 1024
    z = jax.random.normal(kz, (N, DIM), dtype=jnp.float32)
    z_out, log_det = planar_flow(z, u, w, b)
    jax.block_until_ready((z_out, log_det))
    z_ref, ld_ref = _reference(z, u, w, b)
    assert jnp.allclose(z_out, z_ref, atol=1e-5, rtol=1e-5)
    assert jnp.allclose(log_det, ld_ref, atol=1e-5, rtol=1e-5)

    # Ragged batch (exercises the lane-padding path).
    N2 = 300
    z2 = jax.random.normal(jax.random.PRNGKey(1), (N2, DIM), dtype=jnp.float32)
    z2_out, ld2 = planar_flow(z2, u, w, b)
    jax.block_until_ready((z2_out, ld2))
    z2_ref, ld2_ref = _reference(z2, u, w, b)
    assert jnp.allclose(z2_out, z2_ref, atol=1e-5, rtol=1e-5)
    assert jnp.allclose(ld2, ld2_ref, atol=1e-5, rtol=1e-5)

    # Multi-step grid (exercises the >=2-grid-step tiling / dual-TC path).
    N3 = 3000
    z3 = jax.random.normal(jax.random.PRNGKey(2), (N3, DIM), dtype=jnp.float32)
    z3_out, ld3 = planar_flow(z3, u, w, b)
    jax.block_until_ready((z3_out, ld3))
    z3_ref, ld3_ref = _reference(z3, u, w, b)
    assert jnp.allclose(z3_out, z3_ref, atol=1e-5, rtol=1e-5)
    assert jnp.allclose(ld3, ld3_ref, atol=1e-5, rtol=1e-5)

    print("KERNEL_OK")
</pallas_src>

<mosaic_0001>
module attributes {stable_mosaic.version = 11 : i64} {
  func.func @_planar_flow_kernel(%arg0: i32, %arg1: memref<48xf32, #tpu.memory_space<smem>>, %arg2: memref<2x8x128xf32, #tpu.memory_space<vmem>>, %arg3: memref<2x8x128xf32, #tpu.memory_space<vmem>>, %arg4: memref<8x128xf32, #tpu.memory_space<vmem>>) attributes {dimension_semantics = [#tpu.dimension_semantics<parallel>], iteration_bounds = array<i64: 1>, scalar_prefetch = 0 : i64, scratch_operands = 0 : i64, tpu.core_type = #tpu.core_type<tc>, window_params = [{transform_indices = @transform_0, window_bounds = array<i64: 48>}, {transform_indices = @transform_1, window_bounds = array<i64: 2, 8, 128>}, {transform_indices = @transform_2, window_bounds = array<i64: 2, 8, 128>}, {transform_indices = @transform_3, window_bounds = array<i64: 8, 128>}]} {
    %c0 = arith.constant 0 : index
    %c0_0 = arith.constant 0 : index
    %c0_1 = arith.constant 0 : index
    %0 = vector.load %arg2[%c0, %c0_0, %c0_1] : memref<2x8x128xf32, #tpu.memory_space<vmem>>, vector<1x8x128xf32>
    %1 = vector.shape_cast %0 : vector<1x8x128xf32> to vector<8x128xf32>
    %c1 = arith.constant 1 : index
    %c0_2 = arith.constant 0 : index
    %c0_3 = arith.constant 0 : index
    %2 = vector.load %arg2[%c1, %c0_2, %c0_3] : memref<2x8x128xf32, #tpu.memory_space<vmem>>, vector<1x8x128xf32>
    %3 = vector.shape_cast %2 : vector<1x8x128xf32> to vector<8x128xf32>
    %cst = arith.constant 1.000000e+00 : f32
    %4 = vector.broadcast %cst : f32 to vector<8x128xf32>
    %c0_4 = arith.constant 0 : index
    %5 = memref.load %arg1[%c0_4] : memref<48xf32, #tpu.memory_space<smem>>
    %c1_5 = arith.constant 1 : index
    %6 = memref.load %arg1[%c1_5] : memref<48xf32, #tpu.memory_space<smem>>
    %c2 = arith.constant 2 : index
    %7 = memref.load %arg1[%c2] : memref<48xf32, #tpu.memory_space<smem>>
    %c3 = arith.constant 3 : index
    %8 = memref.load %arg1[%c3] : memref<48xf32, #tpu.memory_space<smem>>
    %c4 = arith.constant 4 : index
    %9 = memref.load %arg1[%c4] : memref<48xf32, #tpu.memory_space<smem>>
    %c5 = arith.constant 5 : index
    %10 = memref.load %arg1[%c5] : memref<48xf32, #tpu.memory_space<smem>>
    %c6 = arith.constant 6 : index
    %11 = memref.load %arg1[%c6] : memref<48xf32, #tpu.memory_space<smem>>
    %12 = vector.broadcast %7 : f32 to vector<8x128xf32>
    %13 = arith.mulf %1, %12 : vector<8x128xf32>
    %14 = vector.broadcast %8 : f32 to vector<8x128xf32>
    %15 = arith.mulf %3, %14 : vector<8x128xf32>
    %16 = arith.addf %13, %15 : vector<8x128xf32>
    %17 = vector.broadcast %9 : f32 to vector<8x128xf32>
    %18 = arith.addf %16, %17 : vector<8x128xf32>
    %19 = math.tanh %18 : vector<8x128xf32>
    %20 = arith.mulf %19, %19 : vector<8x128xf32>
    %21 = vector.broadcast %10 : f32 to vector<8x128xf32>
    %22 = arith.mulf %21, %20 : vector<8x128xf32>
    %23 = vector.broadcast %11 : f32 to vector<8x128xf32>
    %24 = arith.subf %23, %22 : vector<8x128xf32>
    %25 = math.absf %24 : vector<8x128xf32>
    %cst_6 = arith.constant 9.99999993E-9 : f32
    %26 = vector.broadcast %cst_6 : f32 to vector<8x128xf32>
    %27 = arith.addf %25, %26 : vector<8x128xf32>
    %28 = arith.mulf %4, %27 : vector<8x128xf32>
    %29 = vector.broadcast %5 : f32 to vector<8x128xf32>
    %30 = arith.mulf %29, %19 : vector<8x128xf32>
    %31 = arith.addf %1, %30 : vector<8x128xf32>
    %32 = vector.broadcast %6 : f32 to vector<8x128xf32>
    %33 = arith.mulf %32, %19 : vector<8x128xf32>
    %34 = arith.addf %3, %33 : vector<8x128xf32>
    %c8 = arith.constant 8 : index
    %35 = memref.load %arg1[%c8] : memref<48xf32, #tpu.memory_space<smem>>
    %c9 = arith.constant 9 : index
    %36 = memref.load %arg1[%c9] : memref<48xf32, #tpu.memory_space<smem>>
    %c10 = arith.constant 10 : index
    %37 = memref.load %arg1[%c10] : memref<48xf32, #tpu.memory_space<smem>>
    %c11 = arith.constant 11 : index
    %38 = memref.load %arg1[%c11] : memref<48xf32, #tpu.memory_space<smem>>
    %c12 = arith.constant 12 : index
    %39 = memref.load %arg1[%c12] : memref<48xf32, #tpu.memory_space<smem>>
    %c13 = arith.constant 13 : index
    %40 = memref.load %arg1[%c13] : memref<48xf32, #tpu.memory_space<smem>>
    %c14 = arith.constant 14 : index
    %41 = memref.load %arg1[%c14] : memref<48xf32, #tpu.memory_space<smem>>
    %42 = vector.broadcast %37 : f32 to vector<8x128xf32>
    %43 = arith.mulf %31, %42 : vector<8x128xf32>
    %44 = vector.broadcast %38 : f32 to vector<8x128xf32>
    %45 = arith.mulf %34, %44 : vector<8x128xf32>
    %46 = arith.addf %43, %45 : vector<8x128xf32>
    %47 = vector.broadcast %39 : f32 to vector<8x128xf32>
    %48 = arith.addf %46, %47 : vector<8x128xf32>
    %49 = math.tanh %48 : vector<8x128xf32>
    %50 = arith.mulf %49, %49 : vector<8x128xf32>
    %51 = vector.broadcast %40 : f32 to vector<8x128xf32>
    %52 = arith.mulf %51, %50 : vector<8x128xf32>
    %53 = vector.broadcast %41 : f32 to vector<8x128xf32>
    %54 = arith.subf %53, %52 : vector<8x128xf32>
    %55 = math.absf %54 : vector<8x128xf32>
    %cst_7 = arith.constant 9.99999993E-9 : f32
    %56 = vector.broadcast %cst_7 : f32 to vector<8x128xf32>
    %57 = arith.addf %55, %56 : vector<8x128xf32>
    %58 = arith.mulf %28, %57 : vector<8x128xf32>
    %59 = vector.broadcast %35 : f32 to vector<8x128xf32>
    %60 = arith.mulf %59, %49 : vector<8x128xf32>
    %61 = arith.addf %31, %60 : vector<8x128xf32>
    %62 = vector.broadcast %36 : f32 to vector<8x128xf32>
    %63 = arith.mulf %62, %49 : vector<8x128xf32>
    %64 = arith.addf %34, %63 : vector<8x128xf32>
    %c16 = arith.constant 16 : index
    %65 = memref.load %arg1[%c16] : memref<48xf32, #tpu.memory_space<smem>>
    %c17 = arith.constant 17 : index
    %66 = memref.load %arg1[%c17] : memref<48xf32, #tpu.memory_space<smem>>
    %c18 = arith.constant 18 : index
    %67 = memref.load %arg1[%c18] : memref<48xf32, #tpu.memory_space<smem>>
    %c19 = arith.constant 19 : index
    %68 = memref.load %arg1[%c19] : memref<48xf32, #tpu.memory_space<smem>>
    %c20 = arith.constant 20 : index
    %69 = memref.load %arg1[%c20] : memref<48xf32, #tpu.memory_space<smem>>
    %c21 = arith.constant 21 : index
    %70 = memref.load %arg1[%c21] : memref<48xf32, #tpu.memory_space<smem>>
    %c22 = arith.constant 22 : index
    %71 = memref.load %arg1[%c22] : memref<48xf32, #tpu.memory_space<smem>>
    %72 = vector.broadcast %67 : f32 to vector<8x128xf32>
    %73 = arith.mulf %61, %72 : vector<8x128xf32>
    %74 = vector.broadcast %68 : f32 to vector<8x128xf32>
    %75 = arith.mulf %64, %74 : vector<8x128xf32>
    %76 = arith.addf %73, %75 : vector<8x128xf32>
    %77 = vector.broadcast %69 : f32 to vector<8x128xf32>
    %78 = arith.addf %76, %77 : vector<8x128xf32>
    %79 = math.tanh %78 : vector<8x128xf32>
    %80 = arith.mulf %79, %79 : vector<8x128xf32>
    %81 = vector.broadcast %70 : f32 to vector<8x128xf32>
    %82 = arith.mulf %81, %80 : vector<8x128xf32>
    %83 = vector.broadcast %71 : f32 to vector<8x128xf32>
    %84 = arith.subf %83, %82 : vector<8x128xf32>
    %85 = math.absf %84 : vector<8x128xf32>
    %cst_8 = arith.constant 9.99999993E-9 : f32
    %86 = vector.broadcast %cst_8 : f32 to vector<8x128xf32>
    %87 = arith.addf %85, %86 : vector<8x128xf32>
    %88 = arith.mulf %58, %87 : vector<8x128xf32>
    %89 = vector.broadcast %65 : f32 to vector<8x128xf32>
    %90 = arith.mulf %89, %79 : vector<8x128xf32>
    %91 = arith.addf %61, %90 : vector<8x128xf32>
    %92 = vector.broadcast %66 : f32 to vector<8x128xf32>
    %93 = arith.mulf %92, %79 : vector<8x128xf32>
    %94 = arith.addf %64, %93 : vector<8x128xf32>
    %c24 = arith.constant 24 : index
    %95 = memref.load %arg1[%c24] : memref<48xf32, #tpu.memory_space<smem>>
    %c25 = arith.constant 25 : index
    %96 = memref.load %arg1[%c25] : memref<48xf32, #tpu.memory_space<smem>>
    %c26 = arith.constant 26 : index
    %97 = memref.load %arg1[%c26] : memref<48xf32, #tpu.memory_space<smem>>
    %c27 = arith.constant 27 : index
    %98 = memref.load %arg1[%c27] : memref<48xf32, #tpu.memory_space<smem>>
    %c28 = arith.constant 28 : index
    %99 = memref.load %arg1[%c28] : memref<48xf32, #tpu.memory_space<smem>>
    %c29 = arith.constant 29 : index
    %100 = memref.load %arg1[%c29] : memref<48xf32, #tpu.memory_space<smem>>
    %c30 = arith.constant 30 : index
    %101 = memref.load %arg1[%c30] : memref<48xf32, #tpu.memory_space<smem>>
    %102 = vector.broadcast %97 : f32 to vector<8x128xf32>
    %103 = arith.mulf %91, %102 : vector<8x128xf32>
    %104 = vector.broadcast %98 : f32 to vector<8x128xf32>
    %105 = arith.mulf %94, %104 : vector<8x128xf32>
    %106 = arith.addf %103, %105 : vector<8x128xf32>
    %107 = vector.broadcast %99 : f32 to vector<8x128xf32>
    %108 = arith.addf %106, %107 : vector<8x128xf32>
    %109 = math.tanh %108 : vector<8x128xf32>
    %110 = arith.mulf %109, %109 : vector<8x128xf32>
    %111 = vector.broadcast %100 : f32 to vector<8x128xf32>
    %112 = arith.mulf %111, %110 : vector<8x128xf32>
    %113 = vector.broadcast %101 : f32 to vector<8x128xf32>
    %114 = arith.subf %113, %112 : vector<8x128xf32>
    %115 = math.absf %114 : vector<8x128xf32>
    %cst_9 = arith.constant 9.99999993E-9 : f32
    %116 = vector.broadcast %cst_9 : f32 to vector<8x128xf32>
    %117 = arith.addf %115, %116 : vector<8x128xf32>
    %118 = arith.mulf %88, %117 : vector<8x128xf32>
    %119 = vector.broadcast %95 : f32 to vector<8x128xf32>
    %120 = arith.mulf %119, %109 : vector<8x128xf32>
    %121 = arith.addf %91, %120 : vector<8x128xf32>
    %122 = vector.broadcast %96 : f32 to vector<8x128xf32>
    %123 = arith.mulf %122, %109 : vector<8x128xf32>
    %124 = arith.addf %94, %123 : vector<8x128xf32>
    %c32 = arith.constant 32 : index
    %125 = memref.load %arg1[%c32] : memref<48xf32, #tpu.memory_space<smem>>
    %c33 = arith.constant 33 : index
    %126 = memref.load %arg1[%c33] : memref<48xf32, #tpu.memory_space<smem>>
    %c34 = arith.constant 34 : index
    %127 = memref.load %arg1[%c34] : memref<48xf32, #tpu.memory_space<smem>>
    %c35 = arith.constant 35 : index
    %128 = memref.load %arg1[%c35] : memref<48xf32, #tpu.memory_space<smem>>
    %c36 = arith.constant 36 : index
    %129 = memref.load %arg1[%c36] : memref<48xf32, #tpu.memory_space<smem>>
    %c37 = arith.constant 37 : index
    %130 = memref.load %arg1[%c37] : memref<48xf32, #tpu.memory_space<smem>>
    %c38 = arith.constant 38 : index
    %131 = memref.load %arg1[%c38] : memref<48xf32, #tpu.memory_space<smem>>
    %132 = vector.broadcast %127 : f32 to vector<8x128xf32>
    %133 = arith.mulf %121, %132 : vector<8x128xf32>
    %134 = vector.broadcast %128 : f32 to vector<8x128xf32>
    %135 = arith.mulf %124, %134 : vector<8x128xf32>
    %136 = arith.addf %133, %135 : vector<8x128xf32>
    %137 = vector.broadcast %129 : f32 to vector<8x128xf32>
    %138 = arith.addf %136, %137 : vector<8x128xf32>
    %139 = math.tanh %138 : vector<8x128xf32>
    %140 = arith.mulf %139, %139 : vector<8x128xf32>
    %141 = vector.broadcast %130 : f32 to vector<8x128xf32>
    %142 = arith.mulf %141, %140 : vector<8x128xf32>
    %143 = vector.broadcast %131 : f32 to vector<8x128xf32>
    %144 = arith.subf %143, %142 : vector<8x128xf32>
    %145 = math.absf %144 : vector<8x128xf32>
    %cst_10 = arith.constant 9.99999993E-9 : f32
    %146 = vector.broadcast %cst_10 : f32 to vector<8x128xf32>
    %147 = arith.addf %145, %146 : vector<8x128xf32>
    %148 = arith.mulf %118, %147 : vector<8x128xf32>
    %149 = vector.broadcast %125 : f32 to vector<8x128xf32>
    %150 = arith.mulf %149, %139 : vector<8x128xf32>
    %151 = arith.addf %121, %150 : vector<8x128xf32>
    %152 = vector.broadcast %126 : f32 to vector<8x128xf32>
    %153 = arith.mulf %152, %139 : vector<8x128xf32>
    %154 = arith.addf %124, %153 : vector<8x128xf32>
    %c40 = arith.constant 40 : index
    %155 = memref.load %arg1[%c40] : memref<48xf32, #tpu.memory_space<smem>>
    %c41 = arith.constant 41 : index
    %156 = memref.load %arg1[%c41] : memref<48xf32, #tpu.memory_space<smem>>
    %c42 = arith.constant 42 : index
    %157 = memref.load %arg1[%c42] : memref<48xf32, #tpu.memory_space<smem>>
    %c43 = arith.constant 43 : index
    %158 = memref.load %arg1[%c43] : memref<48xf32, #tpu.memory_space<smem>>
    %c44 = arith.constant 44 : index
    %159 = memref.load %arg1[%c44] : memref<48xf32, #tpu.memory_space<smem>>
    %c45 = arith.constant 45 : index
    %160 = memref.load %arg1[%c45] : memref<48xf32, #tpu.memory_space<smem>>
    %c46 = arith.constant 46 : index
    %161 = memref.load %arg1[%c46] : memref<48xf32, #tpu.memory_space<smem>>
    %162 = vector.broadcast %157 : f32 to vector<8x128xf32>
    %163 = arith.mulf %151, %162 : vector<8x128xf32>
    %164 = vector.broadcast %158 : f32 to vector<8x128xf32>
    %165 = arith.mulf %154, %164 : vector<8x128xf32>
    %166 = arith.addf %163, %165 : vector<8x128xf32>
    %167 = vector.broadcast %159 : f32 to vector<8x128xf32>
    %168 = arith.addf %166, %167 : vector<8x128xf32>
    %169 = math.tanh %168 : vector<8x128xf32>
    %170 = arith.mulf %169, %169 : vector<8x128xf32>
    %171 = vector.broadcast %160 : f32 to vector<8x128xf32>
    %172 = arith.mulf %171, %170 : vector<8x128xf32>
    %173 = vector.broadcast %161 : f32 to vector<8x128xf32>
    %174 = arith.subf %173, %172 : vector<8x128xf32>
    %175 = math.absf %174 : vector<8x128xf32>
    %cst_11 = arith.constant 9.99999993E-9 : f32
    %176 = vector.broadcast %cst_11 : f32 to vector<8x128xf32>
    %177 = arith.addf %175, %176 : vector<8x128xf32>
    %178 = arith.mulf %148, %177 : vector<8x128xf32>
    %179 = vector.broadcast %155 : f32 to vector<8x128xf32>
    %180 = arith.mulf %179, %169 : vector<8x128xf32>
    %181 = arith.addf %151, %180 : vector<8x128xf32>
    %182 = vector.broadcast %156 : f32 to vector<8x128xf32>
    %183 = arith.mulf %182, %169 : vector<8x128xf32>
    %184 = arith.addf %154, %183 : vector<8x128xf32>
    %c0_12 = arith.constant 0 : index
    %c0_13 = arith.constant 0 : index
    %c0_14 = arith.constant 0 : index
    %185 = vector.load %arg3[%c0_12, %c0_13, %c0_14] : memref<2x8x128xf32, #tpu.memory_space<vmem>>, vector<1x8x128xf32>
    %186 = vector.shape_cast %185 : vector<1x8x128xf32> to vector<8x128xf32>
    %187 = vector.shape_cast %181 : vector<8x128xf32> to vector<1x8x128xf32>
    tpu.vector_store %arg3[%c0_12, %c0_13, %c0_14], %187 {strides = array<i32>} : memref<2x8x128xf32, #tpu.memory_space<vmem>>, vector<1x8x128xf32>,
    %c1_15 = arith.constant 1 : index
    %c0_16 = arith.constant 0 : index
    %c0_17 = arith.constant 0 : index
    %188 = vector.load %arg3[%c1_15, %c0_16, %c0_17] : memref<2x8x128xf32, #tpu.memory_space<vmem>>, vector<1x8x128xf32>
    %189 = vector.shape_cast %188 : vector<1x8x128xf32> to vector<8x128xf32>
    %190 = vector.shape_cast %184 : vector<8x128xf32> to vector<1x8x128xf32>
    tpu.vector_store %arg3[%c1_15, %c0_16, %c0_17], %190 {strides = array<i32>} : memref<2x8x128xf32, #tpu.memory_space<vmem>>, vector<1x8x128xf32>,
    %191 = math.log %178 : vector<8x128xf32>
    %c0_18 = arith.constant 0 : index
    %c0_19 = arith.constant 0 : index
    %192 = vector.load %arg4[%c0_18, %c0_19] : memref<8x128xf32, #tpu.memory_space<vmem>>, vector<8x128xf32>
    tpu.vector_store %arg4[%c0_18, %c0_19], %191 {strides = array<i32>} : memref<8x128xf32, #tpu.memory_space<vmem>>, vector<8x128xf32>,
    return
  }
  func.func @transform_0(%arg0: i32) -> i32 {
    %c0_i32 = arith.constant 0 : i32
    %c0_i32_0 = arith.constant 0 : i32
    return %c0_i32 : i32
  }
  func.func @transform_1(%arg0: i32) -> (i32, i32, i32) {
    %c0_i32 = arith.constant 0 : i32
    %c0_i32_0 = arith.constant 0 : i32
    %c0_i32_1 = arith.constant 0 : i32
    return %c0_i32, %arg0, %c0_i32_0 : i32, i32, i32
  }
  func.func @transform_2(%arg0: i32) -> (i32, i32, i32) {
    %c0_i32 = arith.constant 0 : i32
    %c0_i32_0 = arith.constant 0 : i32
    %c0_i32_1 = arith.constant 0 : i32
    return %c0_i32, %arg0, %c0_i32_0 : i32, i32, i32
  }
  func.func @transform_3(%arg0: i32) -> (i32, i32) {
    %c0_i32 = arith.constant 0 : i32
    %c0_i32_0 = arith.constant 0 : i32
    return %arg0, %c0_i32 : i32, i32
  }
}

</mosaic_0001>

<llo_original>
// kernel: planar_flow_lane_major.1
$region0: #{planar_flow_lane_major.1}
  #allocation0 [shape = 'u32[]', space=smem, size = 0x4, offset = 0x4, fixed_abs, tag = 'smem constant byte address 0x4 - core index']
  #allocation1 [shape = 'u32[144,128]{1,0:T(1,128)}', space=vmem, size = 0x12000, scoped, tag = 'internal scratch']
  %s0 = inlined_call_operand.vmem [shape: f32[48], index: 0, kind: input, shape index: {}]
  %s1 = inlined_call_operand.hbm [shape: f32[2,8,128], index: 1, kind: input, shape index: {}, may-alias: {1,2}]
  %s2 = inlined_call_operand.hbm [shape: f32[2,8,128], index: 2, kind: output, shape index: {0}, may-alias: {1,2}]
  %s3 = inlined_call_operand.hbm [shape: f32[8,128], index: 3, kind: output, shape index: {1}]
  %4 = xla_tuple %s2, %s3
  %s5 = sld [smem:[#allocation0]]
  $region34: #{planar_flow_lane_major.1} parent=0
    _
  %s7 = ssub.s32 1, %s5
  %s8 = scalar_select 0, %s7, %s5
  $region1: #{planar_flow_lane_major.1} parent=0
    #allocation2 [shape = 'u8[512]{0}', space=smem, size = 0x200, scoped, tag = 'input window, operand 0, single buffered']
    #allocation3 [shape = 's32[1]{0}', space=sflag, size = 0x4, scoped, tag = 'scoped memory for planar_flow_lane_major.1']
    #allocation4 [shape = 's32[1]{0}', space=sflag, size = 0x4, scoped, tag = 'scoped memory for planar_flow_lane_major.1']
    #allocation5 [shape = 's32[1]{0}', space=sflag, size = 0x4, scoped, tag = 'scoped memory for planar_flow_lane_major.1']
    #allocation6 [shape = 'u8[8192]{0}', space=vmem, size = 0x2000, scoped, tag = 'input window, operand 1, single buffered']
    #allocation7 [shape = 'u8[8192]{0}', space=vmem, size = 0x2000, scoped, tag = 'output window, operand 0, single buffered']
    #allocation8 [shape = 'u8[4096]{0}', space=vmem, size = 0x1000, scoped, tag = 'output window, operand 1, single buffered']
    #allocation9 [shape = 's32[1]{0}', space=sflag, size = 0x4, scoped, tag = 'scoped memory for planar_flow_lane_major.1']
    %9 = vsyncpa [#allocation5], 0
    %10 = vsyncpa [#allocation3], 0
    %11 = vsyncpa [#allocation4], 0
    %12 = vsyncpa [#allocation9], 0
    // Predicated region
    $region2: #{planar_flow_lane_major.1} parent=1 // pred_check
      _
    $region3: #{planar_flow_lane_major.1} parent=1 // pred_check_branch
      %14 = sbr.rel (0) target = $region5
    $region4: #{planar_flow_lane_major.1} parent=1 // pred_region
      %s16 = ssub.s32 16, 16
      %17 = vsyncadd [#allocation5], %s16
      %s19 = sshll.u32 %s0, 4
      %s20 = int_to_ptr.vmem [resolvable:$true] %s19
      %22 = dma.vmem_to_smem %s20, 16, [#allocation2], [#allocation5]
    $region5: #{planar_flow_lane_major.1} parent=1 // pred_fallthru
      _
    // Predicated region
    $region6: #{planar_flow_lane_major.1} parent=1 // pred_check
      _
    $region7: #{planar_flow_lane_major.1} parent=1 // pred_check_branch
      %24 = sbr.rel (0) target = $region9
    $region8: #{planar_flow_lane_major.1} parent=1 // pred_region
      %s26 = ssub.s32 256, 256
      %27 = vsyncadd [#allocation3], %s26
      %s28 = sshll.u32 [#allocation6], 4
      %s29 = int_to_ptr.vmem [resolvable:$true] %s28
      %34 = dma.hbm_to_vmem [thread:$0]  %s1, 256, %s29, [#allocation3], 128, 128, 8
    $region9: #{planar_flow_lane_major.1} parent=1 // pred_fallthru
      _
    // Predicated region
    $region10: #{planar_flow_lane_major.1} parent=1 // pred_check
      _
    $region11: #{planar_flow_lane_major.1} parent=1 // pred_check_branch
      %36 = sbr.rel (0) target = $region13
    $region12: #{planar_flow_lane_major.1} parent=1 // pred_region
      %37 = dma.done [#allocation5], 16
    $region13: #{planar_flow_lane_major.1} parent=1 // pred_fallthru
      _
    // Predicated region
    $region14: #{planar_flow_lane_major.1} parent=1 // pred_check
      _
    $region15: #{planar_flow_lane_major.1} parent=1 // pred_check_branch
      %39 = sbr.rel (0) target = $region17
    $region16: #{planar_flow_lane_major.1} parent=1 // pred_region
      %40 = dma.done [#allocation3], 256
    $region17: #{planar_flow_lane_major.1} parent=1 // pred_fallthru
      _
    %41 = sfence
    %v42 = vld [vmem:[#allocation6] sm:$0xff]
    %s43 = scalar_lea.vmem [#allocation6], 8
    %v44 = vld [vmem:[%s43] sm:$0xff]
    %s45 = sld [smem:[#allocation2]]
    %s46 = sld [smem:[#allocation2 + $0x1]]
    %s47 = sld [smem:[#allocation2 + $0x2]]
    %s48 = sld [smem:[#allocation2 + $0x3]]
    %s49 = sld [smem:[#allocation2 + $0x4]]
    %s50 = sld [smem:[#allocation2 + $0x5]]
    %s51 = sld [smem:[#allocation2 + $0x6]]
    %v52 = vstv %s47
    %v53 = vmul.f32 %v42, %v52
    %v54 = vstv %s48
    %v55 = vmul.f32 %v44, %v54
    %v56 = vadd.f32 %v53, %v55
    %v57 = vstv %s49
    %v58 = vadd.f32 %v56, %v57
    %v59 = vtanh.pop %v58
    %v60 = vmul.f32 %v59, %v59
    %v61 = vstv %s50
    %v62 = vmul.f32 %v61, %v60
    %v63 = vstv %s51
    %v64 = vsub.f32 %v63, %v62
    %v65 = vand.u32 2147483647, %v64
    %v66 = vadd.f32 %v65, 1e-08
    %v67 = vstv %s45
    %v68 = vmul.f32 %v67, %v59
    %v69 = vadd.f32 %v42, %v68
    %v70 = vstv %s46
    %v71 = vmul.f32 %v70, %v59
    %v72 = vadd.f32 %v44, %v71
    %s73 = sld [smem:[#allocation2 + $0x8]]
    %s74 = sld [smem:[#allocation2 + $0x9]]
    %s75 = sld [smem:[#allocation2 + $0xa]]
    %s76 = sld [smem:[#allocation2 + $0xb]]
    %s77 = sld [smem:[#allocation2 + $0xc]]
    %s78 = sld [smem:[#allocation2 + $0xd]]
    %s79 = sld [smem:[#allocation2 + $0xe]]
    %v80 = vstv %s75
    %v81 = vmul.f32 %v69, %v80
    %v82 = vstv %s76
    %v83 = vmul.f32 %v72, %v82
    %v84 = vadd.f32 %v81, %v83
    %v85 = vstv %s77
    %v86 = vadd.f32 %v84, %v85
    %v87 = vtanh.pop %v86
    %v88 = vmul.f32 %v87, %v87
    %v89 = vstv %s78
    %v90 = vmul.f32 %v89, %v88
    %v91 = vstv %s79
    %v92 = vsub.f32 %v91, %v90
    %v93 = vand.u32 2147483647, %v92
    %v94 = vadd.f32 %v93, 1e-08
    %v95 = vmul.f32 %v66, %v94
    %v96 = vstv %s73
    %v97 = vmul.f32 %v96, %v87
    %v98 = vadd.f32 %v69, %v97
    %v99 = vstv %s74
    %v100 = vmul.f32 %v99, %v87
    %v101 = vadd.f32 %v72, %v100
    %s102 = sld [smem:[#allocation2 + $0x10]]
    %s103 = sld [smem:[#allocation2 + $0x11]]
    %s104 = sld [smem:[#allocation2 + $0x12]]
    %s105 = sld [smem:[#allocation2 + $0x13]]
    %s106 = sld [smem:[#allocation2 + $0x14]]
    %s107 = sld [smem:[#allocation2 + $0x15]]
    %s108 = sld [smem:[#allocation2 + $0x16]]
    %v109 = vstv %s104
    %v110 = vmul.f32 %v98, %v109
    %v111 = vstv %s105
    %v112 = vmul.f32 %v101, %v111
    %v113 = vadd.f32 %v110, %v112
    %v114 = vstv %s106
    %v115 = vadd.f32 %v113, %v114
    %v116 = vtanh.pop %v115
    %v117 = vmul.f32 %v116, %v116
    %v118 = vstv %s107
    %v119 = vmul.f32 %v118, %v117
    %v120 = vstv %s108
    %v121 = vsub.f32 %v120, %v119
    %v122 = vand.u32 2147483647, %v121
    %v123 = vadd.f32 %v122, 1e-08
    %v124 = vmul.f32 %v95, %v123
    %v125 = vstv %s102
    %v126 = vmul.f32 %v125, %v116
    %v127 = vadd.f32 %v98, %v126
    %v128 = vstv %s103
    %v129 = vmul.f32 %v128, %v116
    %v130 = vadd.f32 %v101, %v129
    %s131 = sld [smem:[#allocation2 + $0x18]]
    %s132 = sld [smem:[#allocation2 + $0x19]]
    %s133 = sld [smem:[#allocation2 + $0x1a]]
    %s134 = sld [smem:[#allocation2 + $0x1b]]
    %s135 = sld [smem:[#allocation2 + $0x1c]]
    %s136 = sld [smem:[#allocation2 + $0x1d]]
    %s137 = sld [smem:[#allocation2 + $0x1e]]
    %v138 = vstv %s133
    %v139 = vmul.f32 %v127, %v138
    %v140 = vstv %s134
    %v141 = vmul.f32 %v130, %v140
    %v142 = vadd.f32 %v139, %v141
    %v143 = vstv %s135
    %v144 = vadd.f32 %v142, %v143
    %v145 = vtanh.pop %v144
    %v146 = vmul.f32 %v145, %v145
    %v147 = vstv %s136
    %v148 = vmul.f32 %v147, %v146
    %v149 = vstv %s137
    %v150 = vsub.f32 %v149, %v148
    %v151 = vand.u32 2147483647, %v150
    %v152 = vadd.f32 %v151, 1e-08
    %v153 = vmul.f32 %v124, %v152
    %v154 = vstv %s131
    %v155 = vmul.f32 %v154, %v145
    %v156 = vadd.f32 %v127, %v155
    %v157 = vstv %s132
    %v158 = vmul.f32 %v157, %v145
    %v159 = vadd.f32 %v130, %v158
    %s160 = sld [smem:[#allocation2 + $0x20]]
    %s161 = sld [smem:[#allocation2 + $0x21]]
    %s162 = sld [smem:[#allocation2 + $0x22]]
    %s163 = sld [smem:[#allocation2 + $0x23]]
    %s164 = sld [smem:[#allocation2 + $0x24]]
    %s165 = sld [smem:[#allocation2 + $0x25]]
    %s166 = sld [smem:[#allocation2 + $0x26]]
    %v167 = vstv %s162
    %v168 = vmul.f32 %v156, %v167
    %v169 = vstv %s163
    %v170 = vmul.f32 %v159, %v169
    %v171 = vadd.f32 %v168, %v170
    %v172 = vstv %s164
    %v173 = vadd.f32 %v171, %v172
    %v174 = vtanh.pop %v173
    %v175 = vmul.f32 %v174, %v174
    %v176 = vstv %s165
    %v177 = vmul.f32 %v176, %v175
    %v178 = vstv %s166
    %v179 = vsub.f32 %v178, %v177
    %v180 = vand.u32 2147483647, %v179
    %v181 = vadd.f32 %v180, 1e-08
    %v182 = vmul.f32 %v153, %v181
    %v183 = vstv %s160
    %v184 = vmul.f32 %v183, %v174
    %v185 = vadd.f32 %v156, %v184
    %v186 = vstv %s161
    %v187 = vmul.f32 %v186, %v174
    %v188 = vadd.f32 %v159, %v187
    %s189 = sld [smem:[#allocation2 + $0x28]]
    %s190 = sld [smem:[#allocation2 + $0x29]]
    %s191 = sld [smem:[#allocation2 + $0x2a]]
    %s192 = sld [smem:[#allocation2 + $0x2b]]
    %s193 = sld [smem:[#allocation2 + $0x2c]]
    %s194 = sld [smem:[#allocation2 + $0x2d]]
    %s195 = sld [smem:[#allocation2 + $0x2e]]
    %v196 = vstv %s191
    %v197 = vmul.f32 %v185, %v196
    %v198 = vstv %s192
    %v199 = vmul.f32 %v188, %v198
    %v200 = vadd.f32 %v197, %v199
    %v201 = vstv %s193
    %v202 = vadd.f32 %v200, %v201
    %v203 = vtanh.pop %v202
    %v204 = vmul.f32 %v203, %v203
    %v205 = vstv %s194
    %v206 = vmul.f32 %v205, %v204
    %v207 = vstv %s195
    %v208 = vsub.f32 %v207, %v206
    %v209 = vand.u32 2147483647, %v208
    %v210 = vadd.f32 %v209, 1e-08
    %v211 = vmul.f32 %v182, %v210
    %v212 = vstv %s189
    %v213 = vmul.f32 %v212, %v203
    %v214 = vadd.f32 %v185, %v213
    %v215 = vstv %s190
    %v216 = vmul.f32 %v215, %v203
    %v217 = vadd.f32 %v188, %v216
    %218 = vst [vmem:[#allocation7] sm:$0xff] %v214
    %s219 = scalar_lea.vmem [#allocation7], 8
    %220 = vst [vmem:[%s219] sm:$0xff] %v217
    %v221 = vlog2.pop %v211
    %v222 = vmul.f32 %v221, 0.6931472
    %223 = vst [vmem:[#allocation8] sm:$0xff] %v222
    // Predicated region
    $region18: #{planar_flow_lane_major.1} parent=1 // pred_check
      _
    $region19: #{planar_flow_lane_major.1} parent=1 // pred_check_branch
      %225 = sbr.rel (0) target = $region21
    $region20: #{planar_flow_lane_major.1} parent=1 // pred_region
      %s227 = ssub.s32 256, 256
      %228 = vsyncadd [#allocation4], %s227
      %s229 = sshll.u32 [#allocation7], 4
      %s230 = int_to_ptr.vmem [resolvable:$true] %s229
      %235 = dma.vmem_to_hbm [thread:$0]  %s230, 256, %s2, [#allocation4], 128, 128, 8
    $region21: #{planar_flow_lane_major.1} parent=1 // pred_fallthru
      _
    // Predicated region
    $region22: #{planar_flow_lane_major.1} parent=1 // pred_check
      _
    $region23: #{planar_flow_lane_major.1} parent=1 // pred_check_branch
      %237 = sbr.rel (0) target = $region25
    $region24: #{planar_flow_lane_major.1} parent=1 // pred_region
      %s239 = ssub.s32 128, 128
      %240 = vsyncadd [#allocation9], %s239
      %s242 = sshll.u32 [#allocation8], 4
      %s243 = int_to_ptr.vmem [resolvable:$true] %s242
      %245 = dma.vmem_to_hbm [thread:$0]  %s243, 128, %s3, [#allocation9]
    $region25: #{planar_flow_lane_major.1} parent=1 // pred_fallthru
      _
    // Predicated region
    $region26: #{planar_flow_lane_major.1} parent=1 // pred_check
      _
    $region27: #{planar_flow_lane_major.1} parent=1 // pred_check_branch
      %247 = sbr.rel (0) target = $region29
    $region28: #{planar_flow_lane_major.1} parent=1 // pred_region
      %248 = dma.done [#allocation4], 256
    $region29: #{planar_flow_lane_major.1} parent=1 // pred_fallthru
      _
    // Predicated region
    $region30: #{planar_flow_lane_major.1} parent=1 // pred_check
      _
    $region31: #{planar_flow_lane_major.1} parent=1 // pred_check_branch
      %250 = sbr.rel (0) target = $region33
    $region32: #{planar_flow_lane_major.1} parent=1 // pred_region
      %251 = dma.done [#allocation9], 128
    $region33: #{planar_flow_lane_major.1} parent=1 // pred_fallthru
      _
    %252 = vsyncpa [#allocation3], 1
    %253 = vsyncpa [#allocation4], 1
    %254 = vsyncpa [#allocation9], 1
    %255 = vsyncpa [#allocation5], 1

</llo_original>
